<compile_context>
chip_gen: v7x
topology: tpu7x:2x2x1
jax: 0.10.0
libtpu: 0.0.40
codegen_flags: <defaults>
</compile_context>

<pallas_src>
import jax
import jax.numpy as jnp
from jax import lax
from jax.experimental import pallas as pl
from jax.experimental.pallas import tpu as pltpu


# ----------------------------- small helpers --------------------------------

def _round_up(x, m):
    return (x + m - 1) // m * m


def _device_kind():
    try:
        return jax.devices()[0].device_kind.lower()
    except Exception:
        return ""


def _pick_batch_tile(B, nv_p, kind):
    # v5e MXU is 4x128x128 -> 128 rows already fill M; v6e/v7x prefer ~256 rows.
    target_rows = 128 if "v5" in kind else 256
    tgt = max(1, target_rows // max(nv_p, 1))
    if "v7" in kind:
        # 2 TensorCores/chip: keep >= min(4, B) parallel batch steps so both TCs
        # get work and can still pipeline within a core.
        tb = max(1, min(tgt, max(1, B // min(4, B))))
    else:
        # Single TC (v5e/v6e): fewest grid steps, biggest M per step.
        tb = max(1, min(tgt, B))
    while B % tb:
        tb -= 1
    return tb


def _pick_hk_tile(HK, Dv, Dq, weight_budget_bytes=16 << 20):
    """Largest multiple-of-128 divisor of HK whose double-buffered bf16 weight tiles
    stay under the budget; falls back to full HK when HK is not 128-aligned."""
    if HK % 128 != 0:
        return HK
    cap = max(128, weight_budget_bytes // (4 * (Dv + Dq)))  # 2 weights x 2 bufs x 2 B/elt
    best, t = 128, 128
    while t <= HK:
        if HK % t == 0 and t <= cap:
            best = t
        t += 128
    return best


def _pick_vmem_limit(kind, per_step_bytes):
    cap = (56 << 20) if "v7" in kind else (100 << 20)  # v7x: 64 MiB phys; v5e/v6e: 128 MiB
    want = int(1.5 * per_step_bytes) + (8 << 20)
    return int(max(32 << 20, min(cap, want)))


# --------------------------------- kernel -----------------------------------

def _bcnet_kernel(v_ref, q_ref, wv_ref, bv_ref, wq_ref, bq_ref,
                  hmat_ref, hbias_ref, out_ref, acc_ref):
    k = pl.program_id(1)

    tb, nvp, dv = v_ref.shape
    _, nqp, dq = q_ref.shape
    tk = wv_ref.shape[1]
    glimpse = hmat_ref.shape[1]

    # k == 0: fold the per-glimpse scalar h_bias (SMEM) into the accumulator init.
    @pl.when(k == 0)
    def _init():
        lane = lax.broadcasted_iota(jnp.int32, acc_ref.shape, 2)
        bias = jnp.zeros(acc_ref.shape, jnp.float32)
        for g in range(glimpse):                      # G is tiny (<= 32)
            in_g = (lane >= g * nvp) & (lane < (g + 1) * nvp)
            bias = jnp.where(in_g, hbias_ref[g], bias)
        acc_ref[...] = bias

    # FCNet tiles: ReLU(x @ W[:, k-tile] + b[k-tile]).
    # bf16 operands on the MXU, f32 accumulation + f32 elementwise (bias, ReLU).
    v2 = v_ref[...].reshape(tb * nvp, dv).astype(jnp.bfloat16)
    q2 = q_ref[...].reshape(tb * nqp, dq).astype(jnp.bfloat16)
    v_feat = jnp.maximum(
        jnp.dot(v2, wv_ref[...], preferred_element_type=jnp.float32) + bv_ref[...], 0.0)
    q_feat = jnp.maximum(
        jnp.dot(q2, wq_ref[...], preferred_element_type=jnp.float32) + bq_ref[...], 0.0)

    # Bilinear logits for this HK tile, all glimpses in one batched contraction.
    # h_mat (f32) folded into v_feat so the output's trailing (lane) dim is G*Nv.
    h = (v_feat.reshape(tb, 1, nvp, tk) * hmat_ref[...]).reshape(tb, glimpse * nvp, tk)
    acc_ref[...] += lax.dot_general(
        q_feat.reshape(tb, nqp, tk).astype(jnp.bfloat16),
        h.astype(jnp.bfloat16),
        dimension_numbers=(((2,), (2,)), ((0,), (0,))),   # contract HK tile, batch TB
        preferred_element_type=jnp.float32)               # (TB, Nq, G*Nv) f32

    # Last HK tile: one lane-dense store of the whole block.
    @pl.when(k == pl.num_programs(1) - 1)
    def _finalize():
        out_ref[...] = acc_ref[...]


# -------------------------------- wrapper ------------------------------------

def bcnet_forward(v, q, params, *, glimpse, batch_tile=None, hk_tile=None):
    """v: (B, Nv, v_dim) f32, q: (B, Nq, q_dim) f32 -> (B, glimpse, Nv, Nq) f32."""
    B, Nv, Dv = v.shape
    Bq, Nq, Dq = q.shape
    assert Bq == B
    wv_t, bv, wq_t, bq, h_mat, h_bias = params
    HK = wv_t.shape[1]
    assert wv_t.shape == (Dv, HK) and wq_t.shape == (Dq, HK)
    assert h_mat.shape == (1, glimpse, 1, HK)
    assert h_bias.shape == (1, glimpse, 1, 1)

    kind = _device_kind()

    # Pad Nv/Nq to multiples of 8 so in-kernel reshapes are free layout no-ops.
    Nv_p, Nq_p = _round_up(Nv, 8), _round_up(Nq, 8)
    v_p = v if Nv_p == Nv else jnp.pad(v, ((0, 0), (0, Nv_p - Nv), (0, 0)))
    q_p = q if Nq_p == Nq else jnp.pad(q, ((0, 0), (0, Nq_p - Nq), (0, 0)))

    # bf16 MXU operands; every other tensor stays f32.
    wv_bf = wv_t.astype(jnp.bfloat16)
    wq_bf = wq_t.astype(jnp.bfloat16)
    hbias_vec = h_bias.reshape(glimpse).astype(jnp.float32)   # SMEM scalars

    tb = batch_tile if batch_tile is not None else _pick_batch_tile(B, Nv_p, kind)
    assert B % tb == 0, "batch_tile must divide the batch size"
    tk = hk_tile if hk_tile is not None else _pick_hk_tile(HK, Dv, Dq)
    assert HK % tk == 0 and (tk == HK or tk % 128 == 0)

    out_lane = glimpse * Nv_p
    grid = (B // tb, HK // tk)

    # Advisory cost estimate.
    flops = 2 * B * HK * (Nv_p * Dv + Nq_p * Dq + glimpse * Nv_p * Nq_p)
    bytes_accessed = (4 * (v_p.size + q_p.size + bv.size + bq.size + h_mat.size)
                      + 2 * (wv_bf.size + wq_bf.size) * (B // tb)
                      + 4 * B * Nq_p * out_lane + 4 * glimpse)
    cost = pl.CostEstimate(flops=int(flops), transcendentals=0,
                           bytes_accessed=int(bytes_accessed))

    # Generation-aware VMEM budget from the actual per-step tile bytes.
    f32b, bf16b = 4, 2
    vmem_est = (2 * (f32b * tb * (Nv_p * Dv + Nq_p * Dq)            # v/q tiles (2 bufs)
                     + bf16b * (Dv + Dq) * tk                       # weight tiles (2 bufs)
                     + f32b * (2 + glimpse) * tk)                   # bv/bq/h_mat tiles
                + 2 * f32b * tb * Nq_p * out_lane                   # out block (2 bufs)
                + f32b * tb * Nq_p * out_lane                       # f32 accumulator
                + f32b * tb * (Nv_p + Nq_p) * tk                    # v_feat / q_feat
                + (f32b + bf16b) * tb * glimpse * Nv_p * tk         # h (+ bf16 copy)
                + bf16b * tb * Nq_p * tk)                           # q_feat bf16 copy
    vmem_limit = _pick_vmem_limit(kind, vmem_est)

    grid_spec = pltpu.PrefetchScalarGridSpec(
        num_scalar_prefetch=0,
        grid=grid,
        in_specs=[
            pl.BlockSpec((tb, Nv_p, Dv), lambda b, k: (b, 0, 0)),           # v tile
            pl.BlockSpec((tb, Nq_p, Dq), lambda b, k: (b, 0, 0)),           # q tile
            pl.BlockSpec((Dv, tk), lambda b, k: (0, k)),                    # Wv^T tile (bf16)
            pl.BlockSpec((1, tk), lambda b, k: (0, k)),                     # bv tile
            pl.BlockSpec((Dq, tk), lambda b, k: (0, k)),                    # Wq^T tile (bf16)
            pl.BlockSpec((1, tk), lambda b, k: (0, k)),                     # bq tile
            pl.BlockSpec((1, glimpse, 1, tk), lambda b, k: (0, 0, 0, k)),   # h_mat tile
            pl.BlockSpec(memory_space=pltpu.MemorySpace.SMEM),              # h_bias scalars
        ],
        out_specs=pl.BlockSpec((tb, Nq_p, out_lane), lambda b, k: (b, 0, 0)),
        scratch_shapes=[pltpu.VMEM((tb, Nq_p, out_lane), jnp.float32)],
    )

    out = pl.pallas_call(
        _bcnet_kernel,
        out_shape=jax.ShapeDtypeStruct((B, Nq_p, out_lane), jnp.float32),
        grid_spec=grid_spec,
        compiler_params=pltpu.CompilerParams(
            dimension_semantics=("parallel", "arbitrary"),
            vmem_limit_bytes=vmem_limit),
        cost_estimate=cost,
    )(v_p, q_p, wv_bf, bv, wq_bf, bq, h_mat, hbias_vec)

    # Lane-dense kernel layout (B, Nq_p, G*Nv_p) -> module layout (B, G, Nv, Nq).
    out = out.reshape(B, Nq_p, glimpse, Nv_p).transpose(0, 2, 3, 1)
    return out[:, :, :Nv, :Nq]


# ----------------------- params + pure-JAX references ------------------------

def _weight_norm_effective(w_raw, g_scalar):
    # weight_norm(..., dim=None): W_eff = g * W / ||W||_F  (g is a scalar)
    return g_scalar * w_raw / jnp.sqrt(jnp.sum(w_raw * w_raw))


def make_params(key, v_dim, q_dim, h_dim, k, glimpse):
    HK = h_dim * k
    ks = jax.random.split(key, 6)
    wv_raw = jax.random.normal(ks[0], (HK, v_dim), jnp.float32) * 0.1
    gv = jnp.float32(1.3)
    bv = jax.random.normal(ks[1], (1, HK), jnp.float32) * 0.1
    wq_raw = jax.random.normal(ks[2], (HK, q_dim), jnp.float32) * 0.1
    gq = jnp.float32(0.8)
    bq = jax.random.normal(ks[3], (1, HK), jnp.float32) * 0.1
    h_mat = jax.random.normal(ks[4], (1, glimpse, 1, HK), jnp.float32)
    h_bias = jax.random.normal(ks[5], (1, glimpse, 1, 1), jnp.float32)
    wv_eff = _weight_norm_effective(wv_raw, gv)   # (HK, v_dim)
    wq_eff = _weight_norm_effective(wq_raw, gq)   # (HK, q_dim)
    return (wv_eff.T, bv, wq_eff.T, bq, h_mat, h_bias)   # f32 params


def reference_forward(v, q, params):
    """Pure f32 module semantics."""
    wv_t, bv, wq_t, bq, h_mat, h_bias = params
    v_ = jnp.maximum(v @ wv_t + bv, 0.0)
    q_ = jnp.maximum(q @ wq_t + bq, 0.0)
    h_ = v_[:, None, :, :] * h_mat
    logits = jnp.einsum("bgnh,bmh->bgnm", h_, q_)
    return logits + h_bias


def reference_forward_bf16(v, q, params):
    """Same math with the kernel's bf16 MXU-operand rounding (f32 accumulation)."""
    wv_t, bv, wq_t, bq, h_mat, h_bias = params
    v_ = jnp.maximum(
        jnp.einsum("bnd,dh->bnh", v.astype(jnp.bfloat16), wv_t.astype(jnp.bfloat16),
                   preferred_element_type=jnp.float32) + bv, 0.0)
    q_ = jnp.maximum(
        jnp.einsum("bmd,dh->bmh", q.astype(jnp.bfloat16), wq_t.astype(jnp.bfloat16),
                   preferred_element_type=jnp.float32) + bq, 0.0)
    h_ = v_[:, None, :, :] * h_mat
    logits = jnp.einsum("bgnh,bmh->bgnm", h_.astype(jnp.bfloat16),
                        q_.astype(jnp.bfloat16), preferred_element_type=jnp.float32)
    return logits + h_bias


if __name__ == "__main__":
    # Small shapes consistent with the module (glimpse <= c (=32) branch):
    B, Nv, Nq = 2, 16, 8
    v_dim, q_dim, h_dim, k, glimpse = 32, 32, 32, 3, 2

    key = jax.random.PRNGKey(0)
    kv, kq, kp = jax.random.split(key, 3)
    v = jax.random.normal(kv, (B, Nv, v_dim), jnp.float32)
    q = jax.random.normal(kq, (B, Nq, q_dim), jnp.float32)
    params = make_params(kp, v_dim, q_dim, h_dim, k, glimpse)

    out = bcnet_forward(v, q, params, glimpse=glimpse)
    out = jax.block_until_ready(out)
    assert out.shape == (B, glimpse, Nv, Nq)

    ref_matched = reference_forward_bf16(v, q, params)   # same operand rounding
    ref_f32 = reference_forward(v, q, params)            # true f32 module semantics
    assert jnp.allclose(out, ref_matched, atol=1e-2, rtol=1e-2), "mismatch vs bf16-matched ref"
    assert jnp.allclose(out, ref_f32, atol=5e-2, rtol=5e-2), "mismatch vs f32 reference"

    print("KERNEL_OK")
</pallas_src>

<mosaic_0001>
module attributes {stable_mosaic.version = 11 : i64} {
  func.func @_bcnet_kernel(%arg0: i32, %arg1: i32, %arg2: memref<2x16x32xf32, #tpu.memory_space<vmem>>, %arg3: memref<2x8x32xf32, #tpu.memory_space<vmem>>, %arg4: memref<32x96xbf16, #tpu.memory_space<vmem>>, %arg5: memref<1x96xf32, #tpu.memory_space<vmem>>, %arg6: memref<32x96xbf16, #tpu.memory_space<vmem>>, %arg7: memref<1x96xf32, #tpu.memory_space<vmem>>, %arg8: memref<1x2x1x96xf32, #tpu.memory_space<vmem>>, %arg9: memref<2xf32, #tpu.memory_space<smem>>, %arg10: memref<2x8x32xf32, #tpu.memory_space<vmem>>, %arg11: memref<2x8x32xf32, #tpu.memory_space<vmem>>) attributes {dimension_semantics = [#tpu.dimension_semantics<parallel>, #tpu.dimension_semantics<arbitrary>], iteration_bounds = array<i64: 1, 1>, scalar_prefetch = 0 : i64, scratch_operands = 1 : i64, tpu.core_type = #tpu.core_type<tc>, window_params = [{transform_indices = @transform_0, window_bounds = array<i64: 2, 16, 32>}, {transform_indices = @transform_1, window_bounds = array<i64: 2, 8, 32>}, {transform_indices = @transform_2, window_bounds = array<i64: 32, 96>}, {transform_indices = @transform_3, window_bounds = array<i64: 1, 96>}, {transform_indices = @transform_4, window_bounds = array<i64: 32, 96>}, {transform_indices = @transform_5, window_bounds = array<i64: 1, 96>}, {transform_indices = @transform_6, window_bounds = array<i64: 1, 2, 1, 96>}, {transform_indices = @transform_7, window_bounds = array<i64: 2>}, {transform_indices = @transform_8, window_bounds = array<i64: 2, 8, 32>}]} {
    %c0_i32 = arith.constant 0 : i32
    %0 = arith.cmpi eq, %arg1, %c0_i32 : i32
    %1 = arith.extui %0 : i1 to i32
    %c0_i32_0 = arith.constant 0 : i32
    %2 = arith.cmpi ne, %1, %c0_i32_0 : i32
    scf.if %2 {
      %39 = tpu.iota {dimensions = array<i32: 2>} : vector<2x8x32xi32>
      %cst_30 = arith.constant 0.000000e+00 : f32
      %40 = vector.broadcast %cst_30 : f32 to vector<2x8x32xf32>
      %c0_i32_31 = arith.constant 0 : i32
      %41 = vector.broadcast %c0_i32_31 : i32 to vector<2x8x32xi32>
      %42 = arith.cmpi sge, %39, %41 : vector<2x8x32xi32>
      %c16_i32 = arith.constant 16 : i32
      %43 = vector.broadcast %c16_i32 : i32 to vector<2x8x32xi32>
      %44 = arith.cmpi slt, %39, %43 : vector<2x8x32xi32>
      %45 = arith.andi %42, %44 : vector<2x8x32xi1>
      %c0_32 = arith.constant 0 : index
      %46 = memref.load %arg9[%c0_32] : memref<2xf32, #tpu.memory_space<smem>>
      %47 = vector.broadcast %46 : f32 to vector<2x8x32xf32>
      %48 = arith.select %45, %47, %40 : vector<2x8x32xi1>, vector<2x8x32xf32>
      %c16_i32_33 = arith.constant 16 : i32
      %49 = vector.broadcast %c16_i32_33 : i32 to vector<2x8x32xi32>
      %50 = arith.cmpi sge, %39, %49 : vector<2x8x32xi32>
      %c32_i32 = arith.constant 32 : i32
      %51 = vector.broadcast %c32_i32 : i32 to vector<2x8x32xi32>
      %52 = arith.cmpi slt, %39, %51 : vector<2x8x32xi32>
      %53 = arith.andi %50, %52 : vector<2x8x32xi1>
      %c1 = arith.constant 1 : index
      %54 = memref.load %arg9[%c1] : memref<2xf32, #tpu.memory_space<smem>>
      %55 = vector.broadcast %54 : f32 to vector<2x8x32xf32>
      %56 = arith.select %53, %55, %48 : vector<2x8x32xi1>, vector<2x8x32xf32>
      %c0_34 = arith.constant 0 : index
      %c0_35 = arith.constant 0 : index
      %c0_36 = arith.constant 0 : index
      %57 = vector.load %arg11[%c0_34, %c0_35, %c0_36] : memref<2x8x32xf32, #tpu.memory_space<vmem>>, vector<2x8x32xf32>
      tpu.vector_store %arg11[%c0_34, %c0_35, %c0_36], %56 {strides = array<i32>} : memref<2x8x32xf32, #tpu.memory_space<vmem>>, vector<2x8x32xf32>,
    } else {
    }
    %c0 = arith.constant 0 : index
    %c0_1 = arith.constant 0 : index
    %c0_2 = arith.constant 0 : index
    %3 = vector.load %arg2[%c0, %c0_1, %c0_2] : memref<2x16x32xf32, #tpu.memory_space<vmem>>, vector<2x16x32xf32>
    %4 = vector.shape_cast %3 : vector<2x16x32xf32> to vector<32x32xf32>
    %5 = arith.truncf %4 : vector<32x32xf32> to vector<32x32xbf16>
    %c0_3 = arith.constant 0 : index
    %c0_4 = arith.constant 0 : index
    %c0_5 = arith.constant 0 : index
    %6 = vector.load %arg3[%c0_3, %c0_4, %c0_5] : memref<2x8x32xf32, #tpu.memory_space<vmem>>, vector<2x8x32xf32>
    %7 = vector.shape_cast %6 : vector<2x8x32xf32> to vector<16x32xf32>
    %8 = arith.truncf %7 : vector<16x32xf32> to vector<16x32xbf16>
    %c0_6 = arith.constant 0 : index
    %c0_7 = arith.constant 0 : index
    %9 = vector.load %arg4[%c0_6, %c0_7] : memref<32x96xbf16, #tpu.memory_space<vmem>>, vector<32x96xbf16>
    %cst = arith.constant dense<0.000000e+00> : vector<32x96xf32>
    %10 = tpu.matmul %5, %9, %cst {dimension_numbers = #tpu.dot_dimension_numbers<[1], [0], [0], [1], [0, 0, 1, 1], [], []>} : vector<32x32xbf16>, vector<32x96xbf16>, vector<32x96xf32> -> vector<32x96xf32>
    %c0_8 = arith.constant 0 : index
    %c0_9 = arith.constant 0 : index
    %11 = vector.load %arg5[%c0_8, %c0_9] : memref<1x96xf32, #tpu.memory_space<vmem>>, vector<1x96xf32>
    %12 = vector.broadcast %11 : vector<1x96xf32> to vector<32x96xf32>
    %13 = arith.addf %10, %12 : vector<32x96xf32>
    %cst_10 = arith.constant 0.000000e+00 : f32
    %14 = vector.broadcast %cst_10 : f32 to vector<32x96xf32>
    %15 = arith.maximumf %13, %14 : vector<32x96xf32>
    %c0_11 = arith.constant 0 : index
    %c0_12 = arith.constant 0 : index
    %16 = vector.load %arg6[%c0_11, %c0_12] : memref<32x96xbf16, #tpu.memory_space<vmem>>, vector<32x96xbf16>
    %cst_13 = arith.constant dense<0.000000e+00> : vector<16x96xf32>
    %17 = tpu.matmul %8, %16, %cst_13 {dimension_numbers = #tpu.dot_dimension_numbers<[1], [0], [0], [1], [0, 0, 1, 1], [], []>} : vector<16x32xbf16>, vector<32x96xbf16>, vector<16x96xf32> -> vector<16x96xf32>
    %c0_14 = arith.constant 0 : index
    %c0_15 = arith.constant 0 : index
    %18 = vector.load %arg7[%c0_14, %c0_15] : memref<1x96xf32, #tpu.memory_space<vmem>>, vector<1x96xf32>
    %19 = vector.broadcast %18 : vector<1x96xf32> to vector<16x96xf32>
    %20 = arith.addf %17, %19 : vector<16x96xf32>
    %cst_16 = arith.constant 0.000000e+00 : f32
    %21 = vector.broadcast %cst_16 : f32 to vector<16x96xf32>
    %22 = arith.maximumf %20, %21 : vector<16x96xf32>
    %23 = vector.shape_cast %15 : vector<32x96xf32> to vector<2x1x16x96xf32>
    %c0_17 = arith.constant 0 : index
    %c0_18 = arith.constant 0 : index
    %c0_19 = arith.constant 0 : index
    %c0_20 = arith.constant 0 : index
    %24 = vector.load %arg8[%c0_17, %c0_18, %c0_19, %c0_20] : memref<1x2x1x96xf32, #tpu.memory_space<vmem>>, vector<1x2x1x96xf32>
    %25 = vector.broadcast %23 : vector<2x1x16x96xf32> to vector<2x2x16x96xf32>
    %26 = vector.broadcast %24 : vector<1x2x1x96xf32> to vector<2x2x16x96xf32>
    %27 = arith.mulf %25, %26 : vector<2x2x16x96xf32>
    %28 = vector.shape_cast %27 : vector<2x2x16x96xf32> to vector<2x32x96xf32>
    %c0_21 = arith.constant 0 : index
    %c0_22 = arith.constant 0 : index
    %c0_23 = arith.constant 0 : index
    %29 = vector.load %arg11[%c0_21, %c0_22, %c0_23] : memref<2x8x32xf32, #tpu.memory_space<vmem>>, vector<2x8x32xf32>
    %30 = vector.shape_cast %22 : vector<16x96xf32> to vector<2x8x96xf32>
    %31 = arith.truncf %30 : vector<2x8x96xf32> to vector<2x8x96xbf16>
    %32 = arith.truncf %28 : vector<2x32x96xf32> to vector<2x32x96xbf16>
    %cst_24 = arith.constant dense<0.000000e+00> : vector<2x8x32xf32>
    %33 = tpu.matmul %31, %32, %cst_24 {dimension_numbers = #tpu.dot_dimension_numbers<[2], [2], [1], [1], [0, 0, 0, 1, 1, 1], [0], [0]>} : vector<2x8x96xbf16>, vector<2x32x96xbf16>, vector<2x8x32xf32> -> vector<2x8x32xf32>
    %34 = arith.addf %29, %33 : vector<2x8x32xf32>
    %c0_25 = arith.constant 0 : index
    %c0_26 = arith.constant 0 : index
    %c0_27 = arith.constant 0 : index
    %35 = vector.load %arg11[%c0_25, %c0_26, %c0_27] : memref<2x8x32xf32, #tpu.memory_space<vmem>>, vector<2x8x32xf32>
    tpu.vector_store %arg11[%c0_25, %c0_26, %c0_27], %34 {strides = array<i32>} : memref<2x8x32xf32, #tpu.memory_space<vmem>>, vector<2x8x32xf32>,
    %c0_i32_28 = arith.constant 0 : i32
    %36 = arith.cmpi eq, %arg1, %c0_i32_28 : i32
    %37 = arith.extui %36 : i1 to i32
    %c0_i32_29 = arith.constant 0 : i32
    %38 = arith.cmpi ne, %37, %c0_i32_29 : i32
    scf.if %38 {
      %c0_30 = arith.constant 0 : index
      %c0_31 = arith.constant 0 : index
      %c0_32 = arith.constant 0 : index
      %39 = vector.load %arg11[%c0_30, %c0_31, %c0_32] : memref<2x8x32xf32, #tpu.memory_space<vmem>>, vector<2x8x32xf32>
      %c0_33 = arith.constant 0 : index
      %c0_34 = arith.constant 0 : index
      %c0_35 = arith.constant 0 : index
      %40 = vector.load %arg10[%c0_33, %c0_34, %c0_35] : memref<2x8x32xf32, #tpu.memory_space<vmem>>, vector<2x8x32xf32>
      tpu.vector_store %arg10[%c0_33, %c0_34, %c0_35], %39 {strides = array<i32>} : memref<2x8x32xf32, #tpu.memory_space<vmem>>, vector<2x8x32xf32>,
    } else {
    }
    return
  }
  func.func @transform_0(%arg0: i32, %arg1: i32) -> (i32, i32, i32) {
    %c0_i32 = arith.constant 0 : i32
    %c0_i32_0 = arith.constant 0 : i32
    %c0_i32_1 = arith.constant 0 : i32
    return %arg0, %c0_i32, %c0_i32_0 : i32, i32, i32
  }
  func.func @transform_1(%arg0: i32, %arg1: i32) -> (i32, i32, i32) {
    %c0_i32 = arith.constant 0 : i32
    %c0_i32_0 = arith.constant 0 : i32
    %c0_i32_1 = arith.constant 0 : i32
    return %arg0, %c0_i32, %c0_i32_0 : i32, i32, i32
  }
  func.func @transform_2(%arg0: i32, %arg1: i32) -> (i32, i32) {
    %c0_i32 = arith.constant 0 : i32
    %c0_i32_0 = arith.constant 0 : i32
    return %c0_i32, %arg1 : i32, i32
  }
  func.func @transform_3(%arg0: i32, %arg1: i32) -> (i32, i32) {
    %c0_i32 = arith.constant 0 : i32
    %c0_i32_0 = arith.constant 0 : i32
    return %c0_i32, %arg1 : i32, i32
  }
  func.func @transform_4(%arg0: i32, %arg1: i32) -> (i32, i32) {
    %c0_i32 = arith.constant 0 : i32
    %c0_i32_0 = arith.constant 0 : i32
    return %c0_i32, %arg1 : i32, i32
  }
  func.func @transform_5(%arg0: i32, %arg1: i32) -> (i32, i32) {
    %c0_i32 = arith.constant 0 : i32
    %c0_i32_0 = arith.constant 0 : i32
    return %c0_i32, %arg1 : i32, i32
  }
  func.func @transform_6(%arg0: i32, %arg1: i32) -> (i32, i32, i32, i32) {
    %c0_i32 = arith.constant 0 : i32
    %c0_i32_0 = arith.constant 0 : i32
    %c0_i32_1 = arith.constant 0 : i32
    %c0_i32_2 = arith.constant 0 : i32
    return %c0_i32, %c0_i32_0, %c0_i32_1, %arg1 : i32, i32, i32, i32
  }
  func.func @transform_7(%arg0: i32, %arg1: i32) -> i32 {
    %c0_i32 = arith.constant 0 : i32
    %c0_i32_0 = arith.constant 0 : i32
    return %c0_i32 : i32
  }
  func.func @transform_8(%arg0: i32, %arg1: i32) -> (i32, i32, i32) {
    %c0_i32 = arith.constant 0 : i32
    %c0_i32_0 = arith.constant 0 : i32
    %c0_i32_1 = arith.constant 0 : i32
    return %arg0, %c0_i32, %c0_i32_0 : i32, i32, i32
  }
}

</mosaic_0001>

<llo_original>
// kernel: tpu_custom_call.1
$region0: #{tpu_custom_call.1}
  #allocation0 [shape = 'u32[]', space=smem, size = 0x4, offset = 0x4, fixed_abs, tag = 'smem constant byte address 0x4 - core index']
  #allocation1 [shape = 'u32[144,128]{1,0:T(1,128)}', space=vmem, size = 0x12000, scoped, tag = 'internal scratch']
  #allocation2 [shape = 'f32[2,8,32]{2,1,0:T(8,128)}', space=vmem, size = 0x2000, scoped, tag = 'scratch operand']
  %s0 = inlined_call_operand.hbm [shape: f32[2,16,32], index: 0, kind: input, shape index: {}]
  %s1 = inlined_call_operand.hbm [shape: f32[2,8,32], index: 1, kind: input, shape index: {}]
  %s2 = inlined_call_operand.hbm [shape: bf16[32,96], index: 2, kind: input, shape index: {}]
  %s3 = inlined_call_operand.vmem [shape: f32[1,96], index: 3, kind: input, shape index: {}]
  %s4 = inlined_call_operand.hbm [shape: bf16[32,96], index: 4, kind: input, shape index: {}]
  %s5 = inlined_call_operand.vmem [shape: f32[1,96], index: 5, kind: input, shape index: {}]
  %s6 = inlined_call_operand.vmem [shape: f32[1,2,1,96], index: 6, kind: input, shape index: {}]
  %s7 = inlined_call_operand.vmem [shape: f32[2], index: 7, kind: input, shape index: {}]
  %s8 = inlined_call_operand.hbm [shape: f32[2,8,32], index: 8, kind: output, shape index: {}]
  %s9 = sld [smem:[#allocation0]]
  $region70: #{tpu_custom_call.1} parent=0
    _
  %s11 = ssub.s32 1, %s9
  %s12 = scalar_select 0, %s11, %s9
  $region1: #{tpu_custom_call.1} parent=0
    #allocation3 [shape = 'u8[16384]{0}', space=vmem, size = 0x4000, scoped, tag = 'input window, operand 0, single buffered']
    #allocation4 [shape = 's32[1]{0}', space=sflag, size = 0x4, scoped, tag = 'scoped memory for tpu_custom_call.1']
    #allocation5 [shape = 's32[1]{0}', space=sflag, size = 0x4, scoped, tag = 'scoped memory for tpu_custom_call.1']
    #allocation6 [shape = 's32[1]{0}', space=sflag, size = 0x4, scoped, tag = 'scoped memory for tpu_custom_call.1']
    #allocation7 [shape = 'u8[8192]{0}', space=vmem, size = 0x2000, scoped, tag = 'input window, operand 1, single buffered']
    #allocation8 [shape = 's32[1]{0}', space=sflag, size = 0x4, scoped, tag = 'scoped memory for tpu_custom_call.1']
    #allocation9 [shape = 'u8[8192]{0}', space=vmem, size = 0x2000, scoped, tag = 'input window, operand 2, single buffered']
    #allocation10 [shape = 'u8[8192]{0}', space=vmem, size = 0x2000, scoped, tag = 'input window, operand 4, single buffered']
    #allocation11 [shape = 's32[1]{0}', space=sflag, size = 0x4, scoped, tag = 'scoped memory for tpu_custom_call.1']
    #allocation12 [shape = 'u8[512]{0}', space=smem, size = 0x200, scoped, tag = 'input window, operand 7, single buffered']
    #allocation13 [shape = 'u8[8192]{0}', space=vmem, size = 0x2000, scoped, tag = 'output window, operand 0, single buffered']
    %13 = vsyncpa [#allocation4], 0
    %14 = vsyncpa [#allocation8], 0
    %15 = vsyncpa [#allocation11], 0
    %16 = vsyncpa [#allocation6], 0
    %17 = vsyncpa [#allocation5], 0
    // Predicated region
    $region2: #{tpu_custom_call.1} parent=1 // pred_check
      _
    $region3: #{tpu_custom_call.1} parent=1 // pred_check_branch
      %19 = sbr.rel (0) target = $region5
    $region4: #{tpu_custom_call.1} parent=1 // pred_region
      %s21 = ssub.s32 512, 512
      %22 = vsyncadd [#allocation4], %s21
      %s23 = sshll.u32 [#allocation3], 4
      %s24 = int_to_ptr.vmem [resolvable:$true] %s23
      %29 = dma.hbm_to_vmem [thread:$0]  %s0, 512, %s24, [#allocation4], 128, 128, 8
    $region5: #{tpu_custom_call.1} parent=1 // pred_fallthru
      _
    // Predicated region
    $region6: #{tpu_custom_call.1} parent=1 // pred_check
      _
    $region7: #{tpu_custom_call.1} parent=1 // pred_check_branch
      %31 = sbr.rel (0) target = $region9
    $region8: #{tpu_custom_call.1} parent=1 // pred_region
      %s33 = ssub.s32 256, 256
      %34 = vsyncadd [#allocation8], %s33
      %s35 = sshll.u32 [#allocation7], 4
      %s36 = int_to_ptr.vmem [resolvable:$true] %s35
      %41 = dma.hbm_to_vmem [thread:$0]  %s1, 256, %s36, [#allocation8], 128, 128, 8
    $region9: #{tpu_custom_call.1} parent=1 // pred_fallthru
      _
    // Predicated region
    $region10: #{tpu_custom_call.1} parent=1 // pred_check
      _
    $region11: #{tpu_custom_call.1} parent=1 // pred_check_branch
      %43 = sbr.rel (0) target = $region13
    $region12: #{tpu_custom_call.1} parent=1 // pred_region
      %s45 = ssub.s32 256, 256
      %46 = vsyncadd [#allocation8], %s45
      %s47 = sshll.u32 [#allocation9], 4
      %s48 = int_to_ptr.vmem [resolvable:$true] %s47
      %53 = dma.hbm_to_vmem [thread:$0]  %s2, 256, %s48, [#allocation8], 64, 64, 4
    $region13: #{tpu_custom_call.1} parent=1 // pred_fallthru
      _
    // Predicated region
    $region14: #{tpu_custom_call.1} parent=1 // pred_check
      _
    $region15: #{tpu_custom_call.1} parent=1 // pred_check_branch
      %55 = sbr.rel (0) target = $region17
    $region16: #{tpu_custom_call.1} parent=1 // pred_region
      _
    $region17: #{tpu_custom_call.1} parent=1 // pred_fallthru
      _
    // Predicated region
    $region18: #{tpu_custom_call.1} parent=1 // pred_check
      _
    $region19: #{tpu_custom_call.1} parent=1 // pred_check_branch
      %57 = sbr.rel (0) target = $region21
    $region20: #{tpu_custom_call.1} parent=1 // pred_region
      %s59 = ssub.s32 256, 256
      %60 = vsyncadd [#allocation11], %s59
      %s61 = sshll.u32 [#allocation10], 4
      %s62 = int_to_ptr.vmem [resolvable:$true] %s61
      %67 = dma.hbm_to_vmem [thread:$0]  %s4, 256, %s62, [#allocation11], 64, 64, 4
    $region21: #{tpu_custom_call.1} parent=1 // pred_fallthru
      _
    // Predicated region
    $region22: #{tpu_custom_call.1} parent=1 // pred_check
      _
    $region23: #{tpu_custom_call.1} parent=1 // pred_check_branch
      %69 = sbr.rel (0) target = $region25
    $region24: #{tpu_custom_call.1} parent=1 // pred_region
      _
    $region25: #{tpu_custom_call.1} parent=1 // pred_fallthru
      _
    // Predicated region
    $region26: #{tpu_custom_call.1} parent=1 // pred_check
      _
    $region27: #{tpu_custom_call.1} parent=1 // pred_check_branch
      %71 = sbr.rel (0) target = $region29
    $region28: #{tpu_custom_call.1} parent=1 // pred_region
      _
    $region29: #{tpu_custom_call.1} parent=1 // pred_fallthru
      _
    // Predicated region
    $region30: #{tpu_custom_call.1} parent=1 // pred_check
      _
    $region31: #{tpu_custom_call.1} parent=1 // pred_check_branch
      %73 = sbr.rel (0) target = $region33
    $region32: #{tpu_custom_call.1} parent=1 // pred_region
      %s75 = ssub.s32 16, 16
      %76 = vsyncadd [#allocation6], %s75
      %s78 = sshll.u32 %s7, 4
      %s79 = int_to_ptr.vmem [resolvable:$true] %s78
      %81 = dma.vmem_to_smem %s79, 16, [#allocation12], [#allocation6]
    $region33: #{tpu_custom_call.1} parent=1 // pred_fallthru
      _
    // Predicated region
    $region34: #{tpu_custom_call.1} parent=1 // pred_check
      _
    $region35: #{tpu_custom_call.1} parent=1 // pred_check_branch
      %83 = sbr.rel (0) target = $region37
    $region36: #{tpu_custom_call.1} parent=1 // pred_region
      %84 = dma.done [#allocation4], 512
    $region37: #{tpu_custom_call.1} parent=1 // pred_fallthru
      _
    // Predicated region
    $region38: #{tpu_custom_call.1} parent=1 // pred_check
      _
    $region39: #{tpu_custom_call.1} parent=1 // pred_check_branch
      %86 = sbr.rel (0) target = $region41
    $region40: #{tpu_custom_call.1} parent=1 // pred_region
      %87 = dma.done [#allocation8], 256
    $region41: #{tpu_custom_call.1} parent=1 // pred_fallthru
      _
    // Predicated region
    $region42: #{tpu_custom_call.1} parent=1 // pred_check
      _
    $region43: #{tpu_custom_call.1} parent=1 // pred_check_branch
      %89 = sbr.rel (0) target = $region45
    $region44: #{tpu_custom_call.1} parent=1 // pred_region
      %90 = dma.done [#allocation8], 256
    $region45: #{tpu_custom_call.1} parent=1 // pred_fallthru
      _
    // Predicated region
    $region46: #{tpu_custom_call.1} parent=1 // pred_check
      _
    $region47: #{tpu_custom_call.1} parent=1 // pred_check_branch
      %92 = sbr.rel (0) target = $region49
    $region48: #{tpu_custom_call.1} parent=1 // pred_region
      %93 = dma.done [#allocation11], 256
    $region49: #{tpu_custom_call.1} parent=1 // pred_fallthru
      _
    // Predicated region
    $region50: #{tpu_custom_call.1} parent=1 // pred_check
      _
    $region51: #{tpu_custom_call.1} parent=1 // pred_check_branch
      %95 = sbr.rel (0) target = $region53
    $region52: #{tpu_custom_call.1} parent=1 // pred_region
      %96 = dma.done [#allocation6], 16
    $region53: #{tpu_custom_call.1} parent=1 // pred_fallthru
      _
    %97 = sfence
    %p99 = scmp.eq.s32.totalorder 0, 0
    // Predicated region
    $region54: #{tpu_custom_call.1} parent=1 // pred_check
      %p100 = pneg %p99
    $region55: #{tpu_custom_call.1} parent=1 // pred_check_branch
      %102 = sbr.rel (%p100) target = $region57
    $region56: #{tpu_custom_call.1} parent=1 // pred_region
      %v103 = vlaneseq
      %v104 = vand.u32 %v103, 127
      %vm105 = vcmp.ge.s32.totalorder %v104, 0
      %vm106 = vcmp.lt.s32.totalorder %v104, 16
      %vm107 = vmand %vm105, %vm106
      %s108 = sld [smem:[#allocation12]]
      %v109 = vstv %s108
      %v110 = vsel %vm107, %v109, 0.0
      %vm111 = vcmp.ge.s32.totalorder %v104, 16
      %vm112 = vcmp.lt.s32.totalorder %v104, 32
      %vm113 = vmand %vm111, %vm112
      %s114 = sld [smem:[#allocation12 + $0x1]]
      %v115 = vstv %s114
      %v116 = vsel %vm113, %v115, %v110
      %vm117 = vcmask 261120
      %118 = vst.msk [vmem:[#allocation2] sm:$0xff] %vm117, %v116
      %119 = vst.msk [vmem:[#allocation2 + $0x8] sm:$0xff] %vm117, %v116
    $region57: #{tpu_custom_call.1} parent=1 // pred_fallthru
      _
    %v120 = vld [vmem:[#allocation3] sm:$0xff]
    %v121 = vld [vmem:[#allocation3 + $0x8] sm:$0xff]
    %v122 = vld [vmem:[#allocation3 + $0x10] sm:$0xff]
    %v123 = vld [vmem:[#allocation3 + $0x18] sm:$0xff]
    %v124 = vpack.c.bf16 %v121, %v120
    %v125 = vpack.c.bf16 %v123, %v122
    %v126 = vld [vmem:[#allocation7] sm:$0xff]
    %v127 = vld [vmem:[#allocation7 + $0x8] sm:$0xff]
    %v128 = vpack.c.bf16 %v127, %v126
    %v129 = vld [vmem:[#allocation9] sm:$0xf]
    %v130 = vld [vmem:[#allocation9 + $0x4] sm:$0xf]
    %v131 = vld [vmem:[#allocation9 + $0x8] sm:$0xf]
    %v132 = vld [vmem:[#allocation9 + $0xc] sm:$0xf]
    %v133 = vld [vmem:[%s3] sm:$0x1]
    %v135 = vlaneseq
    %v136 = vshrl.u32 %v135, 7
    %v137 = vsub.s32 0, %v136
    %v138 = vrot.slane %v133, %v137
    %v144 = vunpack.c.l.b16 %v129
    %v145 = vunpack.c.l.b16 %v130
    %v146 = vunpack.c.l.b16 %v131
    %v147 = vunpack.c.l.b16 %v132
    %v148 = vpack.c.b16 %v145, %v144
    %v149 = vpack.c.b16 %v147, %v146
    %vm152 = vcmask 261120
    %v154 = vsel %vm152, %v124, 0
    %v157 = vsel %vm152, %v125, 0
    %159 = vmatprep.subr.bf16.mxu0 0
    %160 = vmatpush1.bf16.msra.mxu0 %v148
    %161 = vmatprep.subr.bf16.mxu0 0
    %162 = vmatpush1.bf16.msra.mxu0 %v149
    %163 = vmatprep.subr.bf16.mxu0 0
    %164 = vmatpush1.bf16.msra.mxu0 0
    %165 = vmatprep.subr.bf16.mxu0 0
    %166 = vmatpush1.bf16.msra.mxu0 0
    %167 = vmatprep.subr.bf16.mxu0 0
    %168 = vmatpush1.bf16.msra.mxu0 0
    %169 = vmatprep.subr.bf16.mxu0 0
    %170 = vmatpush1.bf16.msra.mxu0 0
    %171 = vmatprep.subr.bf16.mxu0 0
    %172 = vmatpush1.bf16.msra.mxu0 0
    %173 = vmatprep.subr.bf16.mxu0 0
    %174 = vmatpush1.bf16.msra.mxu0 0
    %175 = vmatprep.subr.bf16.mxu0 0
    %176 = vmatpush1.bf16.msra.mxu0 0
    %177 = vmatprep.subr.bf16.mxu0 0
    %178 = vmatpush1.bf16.msra.mxu0 0
    %179 = vmatprep.subr.bf16.mxu0 0
    %180 = vmatpush1.bf16.msra.mxu0 0
    %181 = vmatprep.subr.bf16.mxu0 0
    %182 = vmatpush1.bf16.msra.mxu0 0
    %183 = vmatprep.subr.bf16.mxu0 0
    %184 = vmatpush1.bf16.msra.mxu0 0
    %185 = vmatprep.subr.bf16.mxu0 0
    %186 = vmatpush1.bf16.msra.mxu0 0
    %187 = vmatprep.subr.bf16.mxu0 0
    %188 = vmatpush1.bf16.msra.mxu0 0
    %189 = vmatprep.subr.bf16.mxu0 0
    %190 = vmatpush1.bf16.msra.mxu0 0
    %191 = vmatprep.mubr.bf16.mxu0 0
    %192 = vmatmul.mubr.bf16.gmra.mrb[0].mxu0 %v154
    %v193 = vpop.f32.mrb[0].mxu0
    %v194 = vadd.f32 %v138, %v193
    %v195 = vpop.f32.mrb[0].mxu0
    %v196 = vpop.f32.mrb[0].mxu0
    %v197 = vadd.f32 %v138, %v196
    %v198 = vpop.f32.mrb[0].mxu0
    %199 = vmatprep.mubr.bf16.mxu0 0
    %200 = vmatmul.mubr.bf16.gmra.mrb[0].mxu0 %v157
    %v201 = vpop.f32.mrb[0].mxu0
    %v202 = vadd.f32 %v138, %v201
    %v203 = vpop.f32.mrb[0].mxu0
    %v204 = vpop.f32.mrb[0].mxu0
    %v205 = vadd.f32 %v138, %v204
    %v206 = vpop.f32.mrb[0].mxu0
    %207 = vdwg.mxu0
    %v208 = vmax.f32 %v194, 0.0
    %v209 = vmax.f32 %v197, 0.0
    %v210 = vmax.f32 %v202, 0.0
    %v211 = vmax.f32 %v205, 0.0
    %v212 = vld [vmem:[#allocation10] sm:$0xf]
    %v213 = vld [vmem:[#allocation10 + $0x4] sm:$0xf]
    %v214 = vld [vmem:[#allocation10 + $0x8] sm:$0xf]
    %v215 = vld [vmem:[#allocation10 + $0xc] sm:$0xf]
    %v216 = vld [vmem:[%s5] sm:$0x1]
    %v218 = vlaneseq
    %v219 = vshrl.u32 %v218, 7
    %v220 = vsub.s32 0, %v219
    %v221 = vrot.slane %v216, %v220
    %v227 = vunpack.c.l.b16 %v212
    %v228 = vunpack.c.l.b16 %v213
    %v229 = vunpack.c.l.b16 %v214
    %v230 = vunpack.c.l.b16 %v215
    %v231 = vpack.c.b16 %v228, %v227
    %v232 = vpack.c.b16 %v230, %v229
    %v236 = vsel %vm152, %v128, 0
    %238 = vmatprep.subr.bf16.mxu0 0
    %239 = vmatpush1.bf16.msra.mxu0 %v231
    %240 = vmatprep.subr.bf16.mxu0 0
    %241 = vmatpush1.bf16.msra.mxu0 %v232
    %242 = vmatprep.subr.bf16.mxu0 0
    %243 = vmatpush1.bf16.msra.mxu0 0
    %244 = vmatprep.subr.bf16.mxu0 0
    %245 = vmatpush1.bf16.msra.mxu0 0
    %246 = vmatprep.subr.bf16.mxu0 0
    %247 = vmatpush1.bf16.msra.mxu0 0
    %248 = vmatprep.subr.bf16.mxu0 0
    %249 = vmatpush1.bf16.msra.mxu0 0
    %250 = vmatprep.subr.bf16.mxu0 0
    %251 = vmatpush1.bf16.msra.mxu0 0
    %252 = vmatprep.subr.bf16.mxu0 0
    %253 = vmatpush1.bf16.msra.mxu0 0
    %254 = vmatprep.subr.bf16.mxu0 0
    %255 = vmatpush1.bf16.msra.mxu0 0
    %256 = vmatprep.subr.bf16.mxu0 0
    %257 = vmatpush1.bf16.msra.mxu0 0
    %258 = vmatprep.subr.bf16.mxu0 0
    %259 = vmatpush1.bf16.msra.mxu0 0
    %260 = vmatprep.subr.bf16.mxu0 0
    %261 = vmatpush1.bf16.msra.mxu0 0
    %262 = vmatprep.subr.bf16.mxu0 0
    %263 = vmatpush1.bf16.msra.mxu0 0
    %264 = vmatprep.subr.bf16.mxu0 0
    %265 = vmatpush1.bf16.msra.mxu0 0
    %266 = vmatprep.subr.bf16.mxu0 0
    %267 = vmatpush1.bf16.msra.mxu0 0
    %268 = vmatprep.subr.bf16.mxu0 0
    %269 = vmatpush1.bf16.msra.mxu0 0
    %270 = vmatprep.mubr.bf16.mxu0 0
    %271 = vmatmul.mubr.bf16.gmra.mrb[0].mxu0 %v236
    %v272 = vpop.f32.mrb[0].mxu0
    %v273 = vadd.f32 %v221, %v272
    %v274 = vpop.f32.mrb[0].mxu0
    %v275 = vpop.f32.mrb[0].mxu0
    %v276 = vadd.f32 %v221, %v275
    %v277 = vpop.f32.mrb[0].mxu0
    %278 = vdwg.mxu0
    %v279 = vmax.f32 %v273, 0.0
    %v280 = vmax.f32 %v276, 0.0
    %v281 = vld [vmem:[%s6] sm:$0x1]
    %v282 = vld [vmem:[%s6 + $0x1] sm:$0x1]
    %v285 = vlaneseq
    %v286 = vshrl.u32 %v285, 7
    %v287 = vsub.s32 0, %v286
    %v288 = vrot.slane %v281, %v287
    %v289 = vlaneseq
    %v290 = vshrl.u32 %v289, 7
    %v291 = vsub.s32 0, %v290
    %v292 = vrot.slane %v282, %v291
    %v295 = vmul.f32 %v208, %v288
    %v296 = vmul.f32 %v209, %v288
    %v297 = vmul.f32 %v208, %v292
    %v298 = vmul.f32 %v209, %v292
    %v299 = vmul.f32 %v210, %v288
    %v300 = vmul.f32 %v211, %v288
    %v301 = vmul.f32 %v210, %v292
    %v302 = vmul.f32 %v211, %v292
    %v303 = vld [vmem:[#allocation2] sm:$0xff]
    %v304 = vld [vmem:[#allocation2 + $0x8] sm:$0xff]
    %v305 = vpack.c.bf16 %v279, %v279
    %v306 = vpack.c.bf16 %v280, %v280
    %v307 = vpack.c.bf16 %v296, %v295
    %v308 = vpack.c.bf16 %v298, %v297
    %v309 = vpack.c.bf16 %v300, %v299
    %v310 = vpack.c.bf16 %v302, %v301
    %vm311 = vcmask 785408
    %v313 = vsel %vm311, %v305, 0
    %v316 = vsel %vm311, %v307, 0
    %v319 = vsel %vm311, %v308, 0
    %321 = vmatprep.subr.bf16.mxu0 0
    %322 = vmatpush1.bf16.xpose.msra.mxu0 %v316
    %323 = vmatprep.subr.bf16.mxu0 0
    %324 = vmatpush1.bf16.xpose.msra.mxu0 %v319
    %325 = vmatprep.subr.bf16.mxu0 0
    %326 = vmatpush1.bf16.xpose.msra.mxu0 0
    %327 = vmatprep.subr.bf16.mxu0 0
    %328 = vmatpush1.bf16.xpose.msra.mxu0 0
    %329 = vmatprep.subr.bf16.mxu0 0
    %330 = vmatpush1.bf16.xpose.msra.mxu0 0
    %331 = vmatprep.subr.bf16.mxu0 0
    %332 = vmatpush1.bf16.xpose.msra.mxu0 0
    %333 = vmatprep.subr.bf16.mxu0 0
    %334 = vmatpush1.bf16.xpose.msra.mxu0 0
    %335 = vmatprep.subr.bf16.mxu0 0
    %336 = vmatpush1.bf16.xpose.msra.mxu0 0
    %337 = vmatprep.subr.bf16.mxu0 0
    %338 = vmatpush1.bf16.xpose.msra.mxu0 0
    %339 = vmatprep.subr.bf16.mxu0 0
    %340 = vmatpush1.bf16.xpose.msra.mxu0 0
    %341 = vmatprep.subr.bf16.mxu0 0
    %342 = vmatpush1.bf16.xpose.msra.mxu0 0
    %343 = vmatprep.subr.bf16.mxu0 0
    %344 = vmatpush1.bf16.xpose.msra.mxu0 0
    %345 = vmatprep.subr.bf16.mxu0 0
    %346 = vmatpush1.bf16.xpose.msra.mxu0 0
    %347 = vmatprep.subr.bf16.mxu0 0
    %348 = vmatpush1.bf16.xpose.msra.mxu0 0
    %349 = vmatprep.subr.bf16.mxu0 0
    %350 = vmatpush1.bf16.xpose.msra.mxu0 0
    %351 = vmatprep.subr.bf16.mxu0 0
    %352 = vmatpush1.bf16.xpose.msra.mxu0 0
    %353 = vmatprep.mubr.bf16.mxu0 0
    %354 = vmatmul.mubr.bf16.gmra.mrb[0].mxu0 %v313
    %v355 = vpop.f32.mrb[0].mxu0
    %v356 = vadd.f32 0.0, %v355
    %v357 = vpop.f32.mrb[0].mxu0
    %v358 = vpop.f32.mrb[0].mxu0
    %v359 = vpop.f32.mrb[0].mxu0
    %360 = vdwg.mxu0
    %v362 = vsel %vm311, %v306, 0
    %v365 = vsel %vm311, %v309, 0
    %v368 = vsel %vm311, %v310, 0
    %370 = vmatprep.subr.bf16.mxu0 0
    %371 = vmatpush1.bf16.xpose.msra.mxu0 %v365
    %372 = vmatprep.subr.bf16.mxu0 0
    %373 = vmatpush1.bf16.xpose.msra.mxu0 %v368
    %374 = vmatprep.subr.bf16.mxu0 0
    %375 = vmatpush1.bf16.xpose.msra.mxu0 0
    %376 = vmatprep.subr.bf16.mxu0 0
    %377 = vmatpush1.bf16.xpose.msra.mxu0 0
    %378 = vmatprep.subr.bf16.mxu0 0
    %379 = vmatpush1.bf16.xpose.msra.mxu0 0
    %380 = vmatprep.subr.bf16.mxu0 0
    %381 = vmatpush1.bf16.xpose.msra.mxu0 0
    %382 = vmatprep.subr.bf16.mxu0 0
    %383 = vmatpush1.bf16.xpose.msra.mxu0 0
    %384 = vmatprep.subr.bf16.mxu0 0
    %385 = vmatpush1.bf16.xpose.msra.mxu0 0
    %386 = vmatprep.subr.bf16.mxu0 0
    %387 = vmatpush1.bf16.xpose.msra.mxu0 0
    %388 = vmatprep.subr.bf16.mxu0 0
    %389 = vmatpush1.bf16.xpose.msra.mxu0 0
    %390 = vmatprep.subr.bf16.mxu0 0
    %391 = vmatpush1.bf16.xpose.msra.mxu0 0
    %392 = vmatprep.subr.bf16.mxu0 0
    %393 = vmatpush1.bf16.xpose.msra.mxu0 0
    %394 = vmatprep.subr.bf16.mxu0 0
    %395 = vmatpush1.bf16.xpose.msra.mxu0 0
    %396 = vmatprep.subr.bf16.mxu0 0
    %397 = vmatpush1.bf16.xpose.msra.mxu0 0
    %398 = vmatprep.subr.bf16.mxu0 0
    %399 = vmatpush1.bf16.xpose.msra.mxu0 0
    %400 = vmatprep.subr.bf16.mxu0 0
    %401 = vmatpush1.bf16.xpose.msra.mxu0 0
    %402 = vmatprep.mubr.bf16.mxu0 0
    %403 = vmatmul.mubr.bf16.gmra.mrb[0].mxu0 %v362
    %v404 = vpop.f32.mrb[0].mxu0
    %v405 = vadd.f32 0.0, %v404
    %v406 = vpop.f32.mrb[0].mxu0
    %v407 = vpop.f32.mrb[0].mxu0
    %v408 = vpop.f32.mrb[0].mxu0
    %409 = vdwg.mxu0
    %v410 = vadd.f32 %v303, %v356
    %v411 = vadd.f32 %v304, %v405
    %412 = vst.msk [vmem:[#allocation2] sm:$0xff] %vm152, %v410
    %413 = vst.msk [vmem:[#allocation2 + $0x8] sm:$0xff] %vm152, %v411
    // Predicated region
    $region58: #{tpu_custom_call.1} parent=1 // pred_check
      %p414 = pneg %p99
    $region59: #{tpu_custom_call.1} parent=1 // pred_check_branch
      %416 = sbr.rel (%p414) target = $region61
    $region60: #{tpu_custom_call.1} parent=1 // pred_region
      %v417 = vld [vmem:[#allocation2] sm:$0xff]
      %v418 = vld [vmem:[#allocation2 + $0x8] sm:$0xff]
      %419 = vst.msk [vmem:[#allocation13] sm:$0xff] %vm152, %v417
      %420 = vst.msk [vmem:[#allocation13 + $0x8] sm:$0xff] %vm152, %v418
    $region61: #{tpu_custom_call.1} parent=1 // pred_fallthru
      _
    // Predicated region
    $region62: #{tpu_custom_call.1} parent=1 // pred_check
      _
    $region63: #{tpu_custom_call.1} parent=1 // pred_check_branch
      %422 = sbr.rel (0) target = $region65
    $region64: #{tpu_custom_call.1} parent=1 // pred_region
      %s424 = ssub.s32 256, 256
      %425 = vsyncadd [#allocation5], %s424
      %s426 = sshll.u32 [#allocation13], 4
      %s427 = int_to_ptr.vmem [resolvable:$true] %s426
      %432 = dma.vmem_to_hbm [thread:$0]  %s427, 256, %s8, [#allocation5], 128, 128, 8
    $region65: #{tpu_custom_call.1} parent=1 // pred_fallthru
      _
    // Predicated region
    $region66: #{tpu_custom_call.1} parent=1 // pred_check
      _
    $region67: #{tpu_custom_call.1} parent=1 // pred_check_branch
      %434 = sbr.rel (0) target = $region69
    $region68: #{tpu_custom_call.1} parent=1 // pred_region
      %435 = dma.done [#allocation5], 256
    $region69: #{tpu_custom_call.1} parent=1 // pred_fallthru
      _
    %436 = vsyncpa [#allocation4], 1
    %437 = vsyncpa [#allocation8], 1
    %438 = vsyncpa [#allocation11], 1
    %439 = vsyncpa [#allocation5], 1
    %440 = vsyncpa [#allocation6], 1

</llo_original>
